<compile_context>
chip_gen: v7x
topology: tpu7x:2x2x1
jax: 0.10.0
libtpu: 0.0.40
codegen_flags: <defaults>
</compile_context>

<pallas_src>
import functools

import jax
import jax.numpy as jnp
from jax.experimental import pallas as pl
from jax.experimental.pallas import tpu as pltpu


def _round_up(a, m):
    return (a + m - 1) // m * m


def _fused_kernel(w_ref, b_ref, bf_ref, x_ref, wf_ref, out_ref, *, cin, cout, hwp):
    # w_ref : SMEM (cout*cin,)   1x1 conv weight, row-major over (c, i)
    # b_ref : SMEM (cout,)       conv bias
    # bf_ref: SMEM (1,)          effective fc bias (fc bias + border constant)
    # x_ref : VMEM (NB, cin*hwp) per-channel contiguous lane slabs (lane zero-pad)
    # wf_ref: VMEM (cout, hwp)   interior fc weights (lane zero-padded identically)
    # out_ref: VMEM (1, 1, NB)   lane-dense output row
    total = None
    for c in range(cout):
        # 1x1 conv for channel c as VPU broadcast-FMAs (K == cin is tiny).
        acc = x_ref[:, pl.ds(0, hwp)] * w_ref[c * cin]
        for i in range(1, cin):
            acc = acc + x_ref[:, pl.ds(i * hwp, hwp)] * w_ref[c * cin + i]
        act = jnp.maximum(acc + b_ref[c], 0.0)                              # relu
        # Early per-channel lane reduction: only a (NB, 1) column stays live.
        # Lane-padded positions contribute 0 because wf is zero-padded.
        partial = jnp.sum(act * wf_ref[c:c + 1, :], axis=1, keepdims=True)  # (NB, 1)
        total = partial if total is None else total + partial
    res = total + bf_ref[0]                                                 # (NB, 1)
    # Lane-dense store: transpose to (1, NB) so the writeback is unmasked vst.
    out_ref[0] = jnp.transpose(res).astype(out_ref.dtype)


def model_forward(x_nchw, conv_w, conv_b, fc_w, fc_b):
    """x_nchw: (N, Cin, H, W) float32.  Returns (N, 1) float32."""
    N, Cin, H, W = x_nchw.shape
    Cout = conv_w.shape[0]
    Hp, Wp = H + 2, W + 2          # conv output spatial (padding=1, kernel=1)
    HW = H * W                     # interior positions actually touched by x
    HWp = _round_up(HW, 128)       # lane-dense spatial axis per channel

    # --- Batch tiling -------------------------------------------------------
    # Keep the double-buffered x tile under ~16 MiB so it also fits v7x's
    # 64 MiB VMEM; cap NB at 1024 (step overhead already amortized there).
    X_DBUF_BUDGET = 16 << 20
    nb_cap = X_DBUF_BUDGET // (2 * Cin * HWp * 4)
    nb_cap = max(8, min(1024, (nb_cap // 8) * 8))   # NB floors at 8; huge HW
    # would want a spatial grid axis instead (not needed for these shapes).
    if N <= nb_cap:
        # Prefer >=2 tiles so the "parallel" axis can shard across both v7x
        # TensorCores; collapses to one tile for tiny batches.
        NB = max(8, _round_up(-(-N // 2), 8))
    else:
        NB = nb_cap
    n_tiles = -(-N // NB)
    N_pad = n_tiles * NB

    # --- Fold the conv zero-padding border into the fc bias ------------------
    # Border output positions are relu(b_c) regardless of x, so their fc
    # contribution is a constant scalar added to the bias.
    fcw_full = fc_w.reshape(Cout, Hp, Wp).astype(jnp.float32)
    wf_int = fcw_full[:, 1:H + 1, 1:W + 1].reshape(Cout, HW)          # interior
    border_sum = fcw_full.reshape(Cout, -1).sum(axis=1) - wf_int.sum(axis=1)
    bias_eff = fc_b.reshape(()).astype(jnp.float32) + jnp.sum(
        jnp.maximum(conv_b.astype(jnp.float32), 0.0) * border_sum)

    # --- Single-pass x layout -------------------------------------------------
    # (N,Cin,H,W) -> (N,Cin,HW) reshape (free) -> one jnp.pad (batch + lane)
    # -> (N_pad, Cin*HWp) reshape (free).  Exactly one wrapper copy of x.
    x_flat = x_nchw.reshape(N, Cin, HW).astype(jnp.float32)
    x_flat = jnp.pad(x_flat, ((0, N_pad - N), (0, 0), (0, HWp - HW)))
    x_k = x_flat.reshape(N_pad, Cin * HWp)

    wf = jnp.pad(wf_int, ((0, 0), (0, HWp - HW)))                     # (Cout, HWp)

    # Tiny parameters as SMEM scalars (no VMEM slab / double buffer).
    w_s = conv_w.reshape(Cout * Cin).astype(jnp.float32)
    b_s = conv_b.reshape(Cout).astype(jnp.float32)
    bf_s = bias_eff.reshape(1)

    kernel = functools.partial(_fused_kernel, cin=Cin, cout=Cout, hwp=HWp)

    x_tile_bytes = NB * Cin * HWp * 4
    wf_bytes = Cout * HWp * 4
    vmem_limit = min(48 << 20, max(16 << 20, 2 * (x_tile_bytes + wf_bytes) + (2 << 20)))

    out_pad = pl.pallas_call(
        kernel,
        out_shape=jax.ShapeDtypeStruct((n_tiles, 1, NB), jnp.float32),
        grid_spec=pltpu.PrefetchScalarGridSpec(
            num_scalar_prefetch=0,
            grid=(n_tiles,),
            in_specs=[
                pl.BlockSpec(memory_space=pltpu.MemorySpace.SMEM),    # conv w
                pl.BlockSpec(memory_space=pltpu.MemorySpace.SMEM),    # conv b
                pl.BlockSpec(memory_space=pltpu.MemorySpace.SMEM),    # fc bias (eff)
                pl.BlockSpec((NB, Cin * HWp), lambda g: (g, 0)),      # x tile
                pl.BlockSpec((Cout, HWp), lambda g: (0, 0)),          # fc weight
            ],
            out_specs=pl.BlockSpec((1, 1, NB), lambda g: (g, 0, 0)),
        ),
        compiler_params=pltpu.CompilerParams(
            dimension_semantics=("parallel",),
            vmem_limit_bytes=vmem_limit),
    )(w_s, b_s, bf_s, x_k, wf)

    # Padded batch rows compute garbage -> slice them off before returning.
    return out_pad.reshape(N_pad)[:N].reshape(N, 1)


def _reference(x_nchw, conv_w, conv_b, fc_w, fc_b):
    # Pure-JAX reference for a sanity check.
    N, Cin, H, W = x_nchw.shape
    Cout = conv_w.shape[0]
    x_pad = jnp.pad(x_nchw, ((0, 0), (0, 0), (1, 1), (1, 1)))
    conv = jnp.einsum('oc,nchw->nohw', conv_w.reshape(Cout, Cin), x_pad)
    conv = conv + conv_b.reshape(1, Cout, 1, 1)
    v1 = jnp.maximum(conv, 0.0)
    v2 = v1.reshape(N, -1)
    return v2 @ fc_w.T + fc_b


if __name__ == "__main__":
    # Small shapes consistent with the module structure (Cin=2, Cout=4).
    N, Cin, H, W = 2, 2, 16, 16
    Cout = 4
    F = Cout * (H + 2) * (W + 2)   # actual flattened feature count after conv+relu

    key = jax.random.PRNGKey(0)
    k1, k2, k3, k4, k5 = jax.random.split(key, 5)

    x = jax.random.normal(k1, (N, Cin, H, W), dtype=jnp.float32)

    # Deterministic synthetic parameters (xavier-normal-like scale for conv).
    xavier_std = (2.0 / (Cin + Cout)) ** 0.5
    conv_w = xavier_std * jax.random.normal(k2, (Cout, Cin, 1, 1), dtype=jnp.float32)
    conv_b = 0.1 * jax.random.normal(k3, (Cout,), dtype=jnp.float32)
    fc_w = (1.0 / F ** 0.5) * jax.random.normal(k4, (1, F), dtype=jnp.float32)
    fc_b = 0.1 * jax.random.normal(k5, (1,), dtype=jnp.float32)

    out = model_forward(x, conv_w, conv_b, fc_w, fc_b)
    out = jax.block_until_ready(out)

    ref = _reference(x, conv_w, conv_b, fc_w, fc_b)
    assert out.shape == (N, 1), out.shape
    assert jnp.allclose(out, ref, atol=1e-4, rtol=1e-4), (out, ref)

    print("KERNEL_OK")
</pallas_src>

<mosaic_0001>
module attributes {stable_mosaic.version = 11 : i64} {
  func.func @_fused_kernel(%arg0: i32, %arg1: memref<8xf32, #tpu.memory_space<smem>>, %arg2: memref<4xf32, #tpu.memory_space<smem>>, %arg3: memref<1xf32, #tpu.memory_space<smem>>, %arg4: memref<8x512xf32, #tpu.memory_space<vmem>>, %arg5: memref<4x256xf32, #tpu.memory_space<vmem>>, %arg6: memref<1x1x8xf32, #tpu.memory_space<vmem>>) attributes {dimension_semantics = [#tpu.dimension_semantics<parallel>], iteration_bounds = array<i64: 1>, scalar_prefetch = 0 : i64, scratch_operands = 0 : i64, tpu.core_type = #tpu.core_type<tc>, window_params = [{transform_indices = @transform_0, window_bounds = array<i64: 8>}, {transform_indices = @transform_1, window_bounds = array<i64: 4>}, {transform_indices = @transform_2, window_bounds = array<i64: 1>}, {transform_indices = @transform_3, window_bounds = array<i64: 8, 512>}, {pipeline_mode = #tpu.pipeline_mode<synchronous>, transform_indices = @transform_4, window_bounds = array<i64: 4, 256>}, {transform_indices = @transform_5, window_bounds = array<i64: 1, 1, 8>}]} {
    %c0 = arith.constant 0 : index
    %c0_0 = arith.constant 0 : index
    %0 = vector.load %arg4[%c0, %c0_0] : memref<8x512xf32, #tpu.memory_space<vmem>>, vector<8x256xf32>
    %c0_1 = arith.constant 0 : index
    %1 = memref.load %arg1[%c0_1] : memref<8xf32, #tpu.memory_space<smem>>
    %2 = vector.broadcast %1 : f32 to vector<8x256xf32>
    %3 = arith.mulf %0, %2 : vector<8x256xf32>
    %c0_2 = arith.constant 0 : index
    %c256 = arith.constant 256 : index
    %4 = vector.load %arg4[%c0_2, %c256] : memref<8x512xf32, #tpu.memory_space<vmem>>, vector<8x256xf32>
    %c1 = arith.constant 1 : index
    %5 = memref.load %arg1[%c1] : memref<8xf32, #tpu.memory_space<smem>>
    %6 = vector.broadcast %5 : f32 to vector<8x256xf32>
    %7 = arith.mulf %4, %6 : vector<8x256xf32>
    %8 = arith.addf %3, %7 : vector<8x256xf32>
    %c0_3 = arith.constant 0 : index
    %9 = memref.load %arg2[%c0_3] : memref<4xf32, #tpu.memory_space<smem>>
    %10 = vector.broadcast %9 : f32 to vector<8x256xf32>
    %11 = arith.addf %8, %10 : vector<8x256xf32>
    %cst = arith.constant 0.000000e+00 : f32
    %12 = vector.broadcast %cst : f32 to vector<8x256xf32>
    %13 = arith.maximumf %11, %12 : vector<8x256xf32>
    %c0_4 = arith.constant 0 : index
    %c0_5 = arith.constant 0 : index
    %14 = vector.load %arg5[%c0_4, %c0_5] : memref<4x256xf32, #tpu.memory_space<vmem>>, vector<1x256xf32>
    %15 = vector.broadcast %14 : vector<1x256xf32> to vector<8x256xf32>
    %16 = arith.mulf %13, %15 : vector<8x256xf32>
    %cst_6 = arith.constant dense<0.000000e+00> : vector<8xf32>
    %17 = vector.multi_reduction <add>, %16, %cst_6 [1] : vector<8x256xf32> to vector<8xf32>
    %18 = vector.shape_cast %17 : vector<8xf32> to vector<8x1xf32>
    %c0_7 = arith.constant 0 : index
    %c0_8 = arith.constant 0 : index
    %19 = vector.load %arg4[%c0_7, %c0_8] : memref<8x512xf32, #tpu.memory_space<vmem>>, vector<8x256xf32>
    %c2 = arith.constant 2 : index
    %20 = memref.load %arg1[%c2] : memref<8xf32, #tpu.memory_space<smem>>
    %21 = vector.broadcast %20 : f32 to vector<8x256xf32>
    %22 = arith.mulf %19, %21 : vector<8x256xf32>
    %c0_9 = arith.constant 0 : index
    %c256_10 = arith.constant 256 : index
    %23 = vector.load %arg4[%c0_9, %c256_10] : memref<8x512xf32, #tpu.memory_space<vmem>>, vector<8x256xf32>
    %c3 = arith.constant 3 : index
    %24 = memref.load %arg1[%c3] : memref<8xf32, #tpu.memory_space<smem>>
    %25 = vector.broadcast %24 : f32 to vector<8x256xf32>
    %26 = arith.mulf %23, %25 : vector<8x256xf32>
    %27 = arith.addf %22, %26 : vector<8x256xf32>
    %c1_11 = arith.constant 1 : index
    %28 = memref.load %arg2[%c1_11] : memref<4xf32, #tpu.memory_space<smem>>
    %29 = vector.broadcast %28 : f32 to vector<8x256xf32>
    %30 = arith.addf %27, %29 : vector<8x256xf32>
    %cst_12 = arith.constant 0.000000e+00 : f32
    %31 = vector.broadcast %cst_12 : f32 to vector<8x256xf32>
    %32 = arith.maximumf %30, %31 : vector<8x256xf32>
    %c1_13 = arith.constant 1 : index
    %c0_14 = arith.constant 0 : index
    %33 = vector.load %arg5[%c1_13, %c0_14] : memref<4x256xf32, #tpu.memory_space<vmem>>, vector<1x256xf32>
    %34 = vector.broadcast %33 : vector<1x256xf32> to vector<8x256xf32>
    %35 = arith.mulf %32, %34 : vector<8x256xf32>
    %cst_15 = arith.constant dense<0.000000e+00> : vector<8xf32>
    %36 = vector.multi_reduction <add>, %35, %cst_15 [1] : vector<8x256xf32> to vector<8xf32>
    %37 = vector.shape_cast %36 : vector<8xf32> to vector<8x1xf32>
    %38 = arith.addf %18, %37 : vector<8x1xf32>
    %c0_16 = arith.constant 0 : index
    %c0_17 = arith.constant 0 : index
    %39 = vector.load %arg4[%c0_16, %c0_17] : memref<8x512xf32, #tpu.memory_space<vmem>>, vector<8x256xf32>
    %c4 = arith.constant 4 : index
    %40 = memref.load %arg1[%c4] : memref<8xf32, #tpu.memory_space<smem>>
    %41 = vector.broadcast %40 : f32 to vector<8x256xf32>
    %42 = arith.mulf %39, %41 : vector<8x256xf32>
    %c0_18 = arith.constant 0 : index
    %c256_19 = arith.constant 256 : index
    %43 = vector.load %arg4[%c0_18, %c256_19] : memref<8x512xf32, #tpu.memory_space<vmem>>, vector<8x256xf32>
    %c5 = arith.constant 5 : index
    %44 = memref.load %arg1[%c5] : memref<8xf32, #tpu.memory_space<smem>>
    %45 = vector.broadcast %44 : f32 to vector<8x256xf32>
    %46 = arith.mulf %43, %45 : vector<8x256xf32>
    %47 = arith.addf %42, %46 : vector<8x256xf32>
    %c2_20 = arith.constant 2 : index
    %48 = memref.load %arg2[%c2_20] : memref<4xf32, #tpu.memory_space<smem>>
    %49 = vector.broadcast %48 : f32 to vector<8x256xf32>
    %50 = arith.addf %47, %49 : vector<8x256xf32>
    %cst_21 = arith.constant 0.000000e+00 : f32
    %51 = vector.broadcast %cst_21 : f32 to vector<8x256xf32>
    %52 = arith.maximumf %50, %51 : vector<8x256xf32>
    %c2_22 = arith.constant 2 : index
    %c0_23 = arith.constant 0 : index
    %53 = vector.load %arg5[%c2_22, %c0_23] : memref<4x256xf32, #tpu.memory_space<vmem>>, vector<1x256xf32>
    %54 = vector.broadcast %53 : vector<1x256xf32> to vector<8x256xf32>
    %55 = arith.mulf %52, %54 : vector<8x256xf32>
    %cst_24 = arith.constant dense<0.000000e+00> : vector<8xf32>
    %56 = vector.multi_reduction <add>, %55, %cst_24 [1] : vector<8x256xf32> to vector<8xf32>
    %57 = vector.shape_cast %56 : vector<8xf32> to vector<8x1xf32>
    %58 = arith.addf %38, %57 : vector<8x1xf32>
    %c0_25 = arith.constant 0 : index
    %c0_26 = arith.constant 0 : index
    %59 = vector.load %arg4[%c0_25, %c0_26] : memref<8x512xf32, #tpu.memory_space<vmem>>, vector<8x256xf32>
    %c6 = arith.constant 6 : index
    %60 = memref.load %arg1[%c6] : memref<8xf32, #tpu.memory_space<smem>>
    %61 = vector.broadcast %60 : f32 to vector<8x256xf32>
    %62 = arith.mulf %59, %61 : vector<8x256xf32>
    %c0_27 = arith.constant 0 : index
    %c256_28 = arith.constant 256 : index
    %63 = vector.load %arg4[%c0_27, %c256_28] : memref<8x512xf32, #tpu.memory_space<vmem>>, vector<8x256xf32>
    %c7 = arith.constant 7 : index
    %64 = memref.load %arg1[%c7] : memref<8xf32, #tpu.memory_space<smem>>
    %65 = vector.broadcast %64 : f32 to vector<8x256xf32>
    %66 = arith.mulf %63, %65 : vector<8x256xf32>
    %67 = arith.addf %62, %66 : vector<8x256xf32>
    %c3_29 = arith.constant 3 : index
    %68 = memref.load %arg2[%c3_29] : memref<4xf32, #tpu.memory_space<smem>>
    %69 = vector.broadcast %68 : f32 to vector<8x256xf32>
    %70 = arith.addf %67, %69 : vector<8x256xf32>
    %cst_30 = arith.constant 0.000000e+00 : f32
    %71 = vector.broadcast %cst_30 : f32 to vector<8x256xf32>
    %72 = arith.maximumf %70, %71 : vector<8x256xf32>
    %c3_31 = arith.constant 3 : index
    %c0_32 = arith.constant 0 : index
    %73 = vector.load %arg5[%c3_31, %c0_32] : memref<4x256xf32, #tpu.memory_space<vmem>>, vector<1x256xf32>
    %74 = vector.broadcast %73 : vector<1x256xf32> to vector<8x256xf32>
    %75 = arith.mulf %72, %74 : vector<8x256xf32>
    %cst_33 = arith.constant dense<0.000000e+00> : vector<8xf32>
    %76 = vector.multi_reduction <add>, %75, %cst_33 [1] : vector<8x256xf32> to vector<8xf32>
    %77 = vector.shape_cast %76 : vector<8xf32> to vector<8x1xf32>
    %78 = arith.addf %58, %77 : vector<8x1xf32>
    %c0_34 = arith.constant 0 : index
    %79 = memref.load %arg3[%c0_34] : memref<1xf32, #tpu.memory_space<smem>>
    %80 = vector.broadcast %79 : f32 to vector<8x1xf32>
    %81 = arith.addf %78, %80 : vector<8x1xf32>
    %82 = tpu.transpose %81, [1, 0] : vector<8x1xf32> -> vector<1x8xf32>
    %c0_35 = arith.constant 0 : index
    %c0_36 = arith.constant 0 : index
    %c0_37 = arith.constant 0 : index
    %83 = vector.load %arg6[%c0_35, %c0_36, %c0_37] : memref<1x1x8xf32, #tpu.memory_space<vmem>>, vector<1x1x8xf32>
    %84 = vector.shape_cast %83 : vector<1x1x8xf32> to vector<1x8xf32>
    %85 = vector.shape_cast %82 : vector<1x8xf32> to vector<1x1x8xf32>
    tpu.vector_store %arg6[%c0_35, %c0_36, %c0_37], %85 {strides = array<i32>} : memref<1x1x8xf32, #tpu.memory_space<vmem>>, vector<1x1x8xf32>,
    return
  }
  func.func @transform_0(%arg0: i32) -> i32 {
    %c0_i32 = arith.constant 0 : i32
    %c0_i32_0 = arith.constant 0 : i32
    return %c0_i32 : i32
  }
  func.func @transform_1(%arg0: i32) -> i32 {
    %c0_i32 = arith.constant 0 : i32
    %c0_i32_0 = arith.constant 0 : i32
    return %c0_i32 : i32
  }
  func.func @transform_2(%arg0: i32) -> i32 {
    %c0_i32 = arith.constant 0 : i32
    %c0_i32_0 = arith.constant 0 : i32
    return %c0_i32 : i32
  }
  func.func @transform_3(%arg0: i32) -> (i32, i32) {
    %c0_i32 = arith.constant 0 : i32
    %c0_i32_0 = arith.constant 0 : i32
    return %arg0, %c0_i32 : i32, i32
  }
  func.func @transform_4(%arg0: i32) -> (i32, i32) {
    %c0_i32 = arith.constant 0 : i32
    %c0_i32_0 = arith.constant 0 : i32
    %c0_i32_1 = arith.constant 0 : i32
    return %c0_i32, %c0_i32_0 : i32, i32
  }
  func.func @transform_5(%arg0: i32) -> (i32, i32, i32) {
    %c0_i32 = arith.constant 0 : i32
    %c0_i32_0 = arith.constant 0 : i32
    %c0_i32_1 = arith.constant 0 : i32
    return %arg0, %c0_i32, %c0_i32_0 : i32, i32, i32
  }
}

</mosaic_0001>

<llo_original>
// kernel: tpu_custom_call.1
$region0: #{tpu_custom_call.1}
  #allocation0 [shape = 'u32[]', space=smem, size = 0x4, offset = 0x4, fixed_abs, tag = 'smem constant byte address 0x4 - core index']
  #allocation1 [shape = 'u32[144,128]{1,0:T(1,128)}', space=vmem, size = 0x12000, scoped, tag = 'internal scratch']
  #allocation2 [shape = 'f32[1]{0:T(128)S(6)}', space=smem, size = 0x200, scoped, tag = 'scoped memory for tpu_custom_call.1']
  %s0 = inlined_call_operand.vmem [shape: f32[8], index: 0, kind: input, shape index: {}]
  %s1 = inlined_call_operand.vmem [shape: f32[4], index: 1, kind: input, shape index: {}]
  %s2 = inlined_call_operand.<no memory space> [shape: f32[1], index: 2, kind: input, shape index: {}]
  %s3 = inlined_call_operand.hbm [shape: f32[8,512], index: 3, kind: input, shape index: {}]
  %s4 = inlined_call_operand.vmem [shape: f32[4,256], index: 4, kind: input, shape index: {}]
  %s5 = inlined_call_operand.hbm [shape: f32[1,1,8], index: 5, kind: output, shape index: {}]
  %s6 = sld [smem:[#allocation0]]
  $region42: #{tpu_custom_call.1} parent=0
    _
  %s8 = ssub.s32 1, %s6
  %s9 = scalar_select 0, %s8, %s6
  %10 = sst [smem:[#allocation2]] %s2
  $region1: #{tpu_custom_call.1} parent=0
    #allocation3 [shape = 'u8[512]{0}', space=smem, size = 0x200, scoped, tag = 'input window, operand 0, single buffered']
    #allocation4 [shape = 's32[1]{0}', space=sflag, size = 0x4, scoped, tag = 'scoped memory for tpu_custom_call.1']
    #allocation5 [shape = 's32[1]{0}', space=sflag, size = 0x4, scoped, tag = 'scoped memory for tpu_custom_call.1']
    #allocation6 [shape = 's32[1]{0}', space=sflag, size = 0x4, scoped, tag = 'scoped memory for tpu_custom_call.1']
    #allocation7 [shape = 'u8[512]{0}', space=smem, size = 0x200, scoped, tag = 'input window, operand 1, single buffered']
    #allocation8 [shape = 's32[1]{0}', space=sflag, size = 0x4, scoped, tag = 'scoped memory for tpu_custom_call.1']
    #allocation9 [shape = 'u8[16384]{0}', space=vmem, size = 0x4000, scoped, tag = 'input window, operand 3, single buffered']
    #allocation10 [shape = 'u8[512]{0}', space=vmem, size = 0x400, scoped, tag = 'output window, operand 0, single buffered']
    %11 = vsyncpa [#allocation6], 0
    %12 = vsyncpa [#allocation8], 0
    %13 = vsyncpa [#allocation4], 0
    %14 = vsyncpa [#allocation5], 0
    // Predicated region
    $region2: #{tpu_custom_call.1} parent=1 // pred_check
      _
    $region3: #{tpu_custom_call.1} parent=1 // pred_check_branch
      %16 = sbr.rel (0) target = $region5
    $region4: #{tpu_custom_call.1} parent=1 // pred_region
      %s18 = ssub.s32 16, 16
      %19 = vsyncadd [#allocation6], %s18
      %s21 = sshll.u32 %s0, 4
      %s22 = int_to_ptr.vmem [resolvable:$true] %s21
      %24 = dma.vmem_to_smem %s22, 16, [#allocation3], [#allocation6]
    $region5: #{tpu_custom_call.1} parent=1 // pred_fallthru
      _
    // Predicated region
    $region6: #{tpu_custom_call.1} parent=1 // pred_check
      _
    $region7: #{tpu_custom_call.1} parent=1 // pred_check_branch
      %26 = sbr.rel (0) target = $region9
    $region8: #{tpu_custom_call.1} parent=1 // pred_region
      %s28 = ssub.s32 16, 16
      %29 = vsyncadd [#allocation8], %s28
      %s31 = sshll.u32 %s1, 4
      %s32 = int_to_ptr.vmem [resolvable:$true] %s31
      %34 = dma.vmem_to_smem %s32, 16, [#allocation7], [#allocation8]
    $region9: #{tpu_custom_call.1} parent=1 // pred_fallthru
      _
    // Predicated region
    $region10: #{tpu_custom_call.1} parent=1 // pred_check
      _
    $region11: #{tpu_custom_call.1} parent=1 // pred_check_branch
      %36 = sbr.rel (0) target = $region13
    $region12: #{tpu_custom_call.1} parent=1 // pred_region
      _
    $region13: #{tpu_custom_call.1} parent=1 // pred_fallthru
      _
    // Predicated region
    $region14: #{tpu_custom_call.1} parent=1 // pred_check
      _
    $region15: #{tpu_custom_call.1} parent=1 // pred_check_branch
      %38 = sbr.rel (0) target = $region17
    $region16: #{tpu_custom_call.1} parent=1 // pred_region
      %s40 = ssub.s32 512, 512
      %41 = vsyncadd [#allocation4], %s40
      %s43 = sshll.u32 [#allocation9], 4
      %s44 = int_to_ptr.vmem [resolvable:$true] %s43
      %46 = dma.hbm_to_vmem [thread:$0]  %s3, 512, %s44, [#allocation4]
    $region17: #{tpu_custom_call.1} parent=1 // pred_fallthru
      _
    // Predicated region
    $region18: #{tpu_custom_call.1} parent=1 // pred_check
      _
    $region19: #{tpu_custom_call.1} parent=1 // pred_check_branch
      %48 = sbr.rel (0) target = $region21
    $region20: #{tpu_custom_call.1} parent=1 // pred_region
      _
    $region21: #{tpu_custom_call.1} parent=1 // pred_fallthru
      _
    // Predicated region
    $region22: #{tpu_custom_call.1} parent=1 // pred_check
      _
    $region23: #{tpu_custom_call.1} parent=1 // pred_check_branch
      %50 = sbr.rel (0) target = $region25
    $region24: #{tpu_custom_call.1} parent=1 // pred_region
      %51 = dma.done [#allocation6], 16
    $region25: #{tpu_custom_call.1} parent=1 // pred_fallthru
      _
    // Predicated region
    $region26: #{tpu_custom_call.1} parent=1 // pred_check
      _
    $region27: #{tpu_custom_call.1} parent=1 // pred_check_branch
      %53 = sbr.rel (0) target = $region29
    $region28: #{tpu_custom_call.1} parent=1 // pred_region
      %54 = dma.done [#allocation8], 16
    $region29: #{tpu_custom_call.1} parent=1 // pred_fallthru
      _
    // Predicated region
    $region30: #{tpu_custom_call.1} parent=1 // pred_check
      _
    $region31: #{tpu_custom_call.1} parent=1 // pred_check_branch
      %56 = sbr.rel (0) target = $region33
    $region32: #{tpu_custom_call.1} parent=1 // pred_region
      %57 = dma.done [#allocation4], 512
    $region33: #{tpu_custom_call.1} parent=1 // pred_fallthru
      _
    %58 = sfence
    %v59 = vld [vmem:[#allocation9] sm:$0xff]
    %v60 = vld [vmem:[#allocation9 + $0x8] sm:$0xff]
    %s61 = sld [smem:[#allocation3]]
    %v62 = vstv %s61
    %v63 = vmul.f32 %v59, %v62
    %v64 = vmul.f32 %v60, %v62
    %v65 = vld [vmem:[#allocation9 + $0x10] sm:$0xff]
    %v66 = vld [vmem:[#allocation9 + $0x18] sm:$0xff]
    %s67 = sld [smem:[#allocation3 + $0x1]]
    %v68 = vstv %s67
    %v69 = vmul.f32 %v65, %v68
    %v70 = vmul.f32 %v66, %v68
    %v71 = vadd.f32 %v63, %v69
    %v72 = vadd.f32 %v64, %v70
    %s73 = sld [smem:[#allocation7]]
    %v74 = vstv %s73
    %v75 = vadd.f32 %v71, %v74
    %v76 = vadd.f32 %v72, %v74
    %v77 = vmax.f32 %v75, 0.0
    %v78 = vmax.f32 %v76, 0.0
    %v79 = vld [vmem:[%s4] ss:$4 sm:$0x3]
    %v81 = vlaneseq
    %v82 = vshrl.u32 %v81, 7
    %v83 = vsub.s32 0, %v82
    %v84 = vrot.slane %v79, %v83
    %v85 = vlaneseq
    %v86 = vshrl.u32 %v85, 7
    %v87 = vsub.s32 1, %v86
    %v88 = vrot.slane %v79, %v87
    %v91 = vmul.f32 %v77, %v84
    %v92 = vmul.f32 %v78, %v88
    %v93 = vadd.f32 %v91, %v92
    %94 = vadd.xlane.f32.xlu0 %v93
    %v95 = vpop.xlane.xlu0 %94
    %s96 = sld [smem:[#allocation3 + $0x2]]
    %v97 = vstv %s96
    %v98 = vmul.f32 %v59, %v97
    %v99 = vmul.f32 %v60, %v97
    %s100 = sld [smem:[#allocation3 + $0x3]]
    %v101 = vstv %s100
    %v102 = vmul.f32 %v65, %v101
    %v103 = vmul.f32 %v66, %v101
    %v104 = vadd.f32 %v98, %v102
    %v105 = vadd.f32 %v99, %v103
    %s106 = sld [smem:[#allocation7 + $0x1]]
    %v107 = vstv %s106
    %v108 = vadd.f32 %v104, %v107
    %v109 = vadd.f32 %v105, %v107
    %v110 = vmax.f32 %v108, 0.0
    %v111 = vmax.f32 %v109, 0.0
    %s112 = scalar_lea.vmem %s4, 1
    %v113 = vld [vmem:[%s112] ss:$4 sm:$0x3]
    %v115 = vlaneseq
    %v116 = vshrl.u32 %v115, 7
    %v117 = vsub.s32 0, %v116
    %v118 = vrot.slane %v113, %v117
    %v119 = vlaneseq
    %v120 = vshrl.u32 %v119, 7
    %v121 = vsub.s32 1, %v120
    %v122 = vrot.slane %v113, %v121
    %v125 = vmul.f32 %v110, %v118
    %v126 = vmul.f32 %v111, %v122
    %v127 = vadd.f32 %v125, %v126
    %128 = vadd.xlane.f32.xlu0 %v127
    %v129 = vpop.xlane.xlu0 %128
    %v130 = vadd.f32 %v95, %v129
    %s131 = sld [smem:[#allocation3 + $0x4]]
    %v132 = vstv %s131
    %v133 = vmul.f32 %v59, %v132
    %v134 = vmul.f32 %v60, %v132
    %s135 = sld [smem:[#allocation3 + $0x5]]
    %v136 = vstv %s135
    %v137 = vmul.f32 %v65, %v136
    %v138 = vmul.f32 %v66, %v136
    %v139 = vadd.f32 %v133, %v137
    %v140 = vadd.f32 %v134, %v138
    %s141 = sld [smem:[#allocation7 + $0x2]]
    %v142 = vstv %s141
    %v143 = vadd.f32 %v139, %v142
    %v144 = vadd.f32 %v140, %v142
    %v145 = vmax.f32 %v143, 0.0
    %v146 = vmax.f32 %v144, 0.0
    %s147 = scalar_lea.vmem %s4, 2
    %v148 = vld [vmem:[%s147] ss:$4 sm:$0x3]
    %v150 = vlaneseq
    %v151 = vshrl.u32 %v150, 7
    %v152 = vsub.s32 0, %v151
    %v153 = vrot.slane %v148, %v152
    %v154 = vlaneseq
    %v155 = vshrl.u32 %v154, 7
    %v156 = vsub.s32 1, %v155
    %v157 = vrot.slane %v148, %v156
    %v160 = vmul.f32 %v145, %v153
    %v161 = vmul.f32 %v146, %v157
    %v162 = vadd.f32 %v160, %v161
    %163 = vadd.xlane.f32.xlu0 %v162
    %v164 = vpop.xlane.xlu0 %163
    %v165 = vadd.f32 %v130, %v164
    %s166 = sld [smem:[#allocation3 + $0x6]]
    %v167 = vstv %s166
    %v168 = vmul.f32 %v59, %v167
    %v169 = vmul.f32 %v60, %v167
    %s170 = sld [smem:[#allocation3 + $0x7]]
    %v171 = vstv %s170
    %v172 = vmul.f32 %v65, %v171
    %v173 = vmul.f32 %v66, %v171
    %v174 = vadd.f32 %v168, %v172
    %v175 = vadd.f32 %v169, %v173
    %s176 = sld [smem:[#allocation7 + $0x3]]
    %v177 = vstv %s176
    %v178 = vadd.f32 %v174, %v177
    %v179 = vadd.f32 %v175, %v177
    %v180 = vmax.f32 %v178, 0.0
    %v181 = vmax.f32 %v179, 0.0
    %s182 = scalar_lea.vmem %s4, 3
    %v183 = vld [vmem:[%s182] ss:$4 sm:$0x3]
    %v185 = vlaneseq
    %v186 = vshrl.u32 %v185, 7
    %v187 = vsub.s32 0, %v186
    %v188 = vrot.slane %v183, %v187
    %v189 = vlaneseq
    %v190 = vshrl.u32 %v189, 7
    %v191 = vsub.s32 1, %v190
    %v192 = vrot.slane %v183, %v191
    %v195 = vmul.f32 %v180, %v188
    %v196 = vmul.f32 %v181, %v192
    %v197 = vadd.f32 %v195, %v196
    %198 = vadd.xlane.f32.xlu0 %v197
    %v199 = vpop.xlane.xlu0 %198
    %v200 = vadd.f32 %v165, %v199
    %s201 = sld [smem:[#allocation2]]
    %v202 = vstv %s201
    %v203 = vadd.f32 %v200, %v202
    %204 = vxpose.xlu0.b32.start [1/16] %v203, 128
    %205 = vxpose.xlu0.b32.cont [2/16] 0.0, 128
    %206 = vxpose.xlu0.b32.cont [3/16] 0.0, 128
    %207 = vxpose.xlu0.b32.cont [4/16] 0.0, 128
    %208 = vxpose.xlu0.b32.cont [5/16] 0.0, 128
    %209 = vxpose.xlu0.b32.cont [6/16] 0.0, 128
    %210 = vxpose.xlu0.b32.cont [7/16] 0.0, 128
    %211 = vxpose.xlu0.b32.cont [8/16] 0.0, 128
    %212 = vxpose.xlu0.b32.cont [9/16] 0.0, 128
    %213 = vxpose.xlu0.b32.cont [10/16] 0.0, 128
    %214 = vxpose.xlu0.b32.cont [11/16] 0.0, 128
    %215 = vxpose.xlu0.b32.cont [12/16] 0.0, 128
    %216 = vxpose.xlu0.b32.cont [13/16] 0.0, 128
    %217 = vxpose.xlu0.b32.cont [14/16] 0.0, 128
    %218 = vxpose.xlu0.b32.cont [15/16] 0.0, 128
    %219 = vxpose.xlu0.b32.end [16/16] 0.0, 128
    %v220 = vpop.trf.xlu0
    %v221 = vpop.trf.xlu0
    %v222 = vpop.trf.xlu0
    %v223 = vpop.trf.xlu0
    %v224 = vpop.trf.xlu0
    %v225 = vpop.trf.xlu0
    %v226 = vpop.trf.xlu0
    %v227 = vpop.trf.xlu0
    %v228 = vpop.trf.xlu0
    %v229 = vpop.trf.xlu0
    %v230 = vpop.trf.xlu0
    %v231 = vpop.trf.xlu0
    %v232 = vpop.trf.xlu0
    %v233 = vpop.trf.xlu0
    %v234 = vpop.trf.xlu0
    %v235 = vpop.trf.xlu0
    %vm236 = vcmask 57344
    %237 = vst.msk [vmem:[#allocation10] sm:$0x1] %vm236, %v220
    // Predicated region
    $region34: #{tpu_custom_call.1} parent=1 // pred_check
      _
    $region35: #{tpu_custom_call.1} parent=1 // pred_check_branch
      %239 = sbr.rel (0) target = $region37
    $region36: #{tpu_custom_call.1} parent=1 // pred_region
      %s241 = ssub.s32 16, 16
      %242 = vsyncadd [#allocation5], %s241
      %s244 = sshll.u32 [#allocation10], 4
      %s245 = int_to_ptr.vmem [resolvable:$true] %s244
      %247 = dma.vmem_to_hbm [thread:$0]  %s245, 16, %s5, [#allocation5]
    $region37: #{tpu_custom_call.1} parent=1 // pred_fallthru
      _
    // Predicated region
    $region38: #{tpu_custom_call.1} parent=1 // pred_check
      _
    $region39: #{tpu_custom_call.1} parent=1 // pred_check_branch
      %249 = sbr.rel (0) target = $region41
    $region40: #{tpu_custom_call.1} parent=1 // pred_region
      %250 = dma.done [#allocation5], 16
    $region41: #{tpu_custom_call.1} parent=1 // pred_fallthru
      _
    %251 = vsyncpa [#allocation4], 1
    %252 = vsyncpa [#allocation5], 1
    %253 = vsyncpa [#allocation6], 1
    %254 = vsyncpa [#allocation8], 1

</llo_original>
